<compile_context>
chip_gen: v6e
topology: v6e:2x2x1
jax: 0.10.0
libtpu: 0.0.40
codegen_flags: <defaults>
</compile_context>

<pallas_src>
import jax
import jax.numpy as jnp
from jax.experimental import pallas as pl
from jax.experimental.pallas import tpu as pltpu


def _round_up(x: int, m: int) -> int:
    return (x + m - 1) // m * m


def _vmem_bytes_2d(rows: int, cols: int, itemsize: int) -> int:
    """Rough VMEM footprint of a 2-D array (rounded up to (8, 128) tiles)."""
    return _round_up(max(rows, 1), 8) * _round_up(max(cols, 1), 128) * itemsize


def _fused_linear_kernel(x_ref, w_ref, b_ref, o_ref):
    """o = x @ [w_pi | w_vf] + [b_pi | b_vf], f32 MXU accumulation.

    x_ref: [TB, F]   features (tile or whole array)
    w_ref: [F, OUT]  fused (policy | value) weights, resident across the grid
    b_ref: [1, OUT]  fused bias row
    o_ref: [TB, OUT] fused output
    """
    acc = jnp.dot(x_ref[...], w_ref[...], preferred_element_type=jnp.float32)
    o_ref[...] = (acc + b_ref[...].astype(jnp.float32)).astype(o_ref.dtype)


def fuse_params(w_pi, b_pi, w_vf, b_vf):
    """Precompute the fused (policy | value) weight/bias once, at init time.

    Keeps the parameters in their own dtype (no downcast to activations dtype).
    """
    w = jnp.concatenate([w_pi, w_vf], axis=1)               # [F, P+V]
    b = jnp.concatenate([b_pi, b_vf], axis=0).reshape(1, -1)  # [1, P+V]
    return w, b


def linear_network_forward(features, w_fused, b_fused, latent_dim_pi,
                           *,
                           small_path_vmem_bytes=12 * 1024 * 1024,
                           tile_vmem_budget=24 * 1024 * 1024):
    """Pallas implementation of LinearNetwork.forward.

    features: [B, F]
    w_fused:  [F, P+V]  (from fuse_params, precomputed once)
    b_fused:  [1, P+V]
    returns (latent_policy [B, P], latent_value [B, V])
    """
    B, F = features.shape
    OUT = w_fused.shape[1]
    P = latent_dim_pi
    out_dtype = jnp.result_type(features.dtype, w_fused.dtype)

    xb = jnp.dtype(features.dtype).itemsize
    wb = jnp.dtype(w_fused.dtype).itemsize
    bb = jnp.dtype(b_fused.dtype).itemsize
    ob = jnp.dtype(out_dtype).itemsize

    vmem = pltpu.MemorySpace.VMEM
    out_shape = jax.ShapeDtypeStruct((B, OUT), out_dtype)

    w_bytes = _vmem_bytes_2d(F, OUT, wb)
    b_bytes = _vmem_bytes_2d(1, OUT, bb)
    small_bytes = (_vmem_bytes_2d(B, F, xb) + w_bytes + b_bytes
                   + _vmem_bytes_2d(B, OUT, ob))

    if small_bytes <= small_path_vmem_bytes:
        # Grid-less path: one whole-array invocation, no pipelining machinery,
        # no double buffering, no batch padding/copies. Gated on estimated
        # VMEM bytes so it stays safe on v7x (64 MiB physical) and under
        # v5e's 16 MiB default scoped limit without extra flags.
        out = pl.pallas_call(
            _fused_linear_kernel,
            out_shape=out_shape,
            in_specs=[
                pl.BlockSpec(memory_space=vmem),
                pl.BlockSpec(memory_space=vmem),
                pl.BlockSpec(memory_space=vmem),
            ],
            out_specs=pl.BlockSpec(memory_space=vmem),
        )(features, w_fused, b_fused)
    else:
        # Batch-tiled path: grid over B, weights/bias resident in VMEM
        # (constant index_map). Tile size adapts to F so small-F problems get
        # big tiles (amortizing per-step pipeline overhead) and large-F
        # problems shrink below the VMEM budget.
        per_row = 2 * (_round_up(F, 128) * xb + _round_up(OUT, 128) * ob)
        resident = 2 * (w_bytes + b_bytes)
        tb = ((tile_vmem_budget - resident) // per_row) // 8 * 8
        # Keep >= 2 "parallel" grid tiles so v7x megacore can shard the batch.
        tb = min(max(tb, 8), _round_up(pl.cdiv(B, 2), 8), 4096)
        grid = (pl.cdiv(B, tb),)  # ragged last block handled by Pallas masking

        vmem_need = 2 * (_vmem_bytes_2d(tb, F, xb)
                         + _vmem_bytes_2d(tb, OUT, ob)
                         + w_bytes + b_bytes)
        vmem_limit = int(min(vmem_need + vmem_need // 2 + (2 << 20), 48 << 20))

        out = pl.pallas_call(
            _fused_linear_kernel,
            out_shape=out_shape,
            grid=grid,
            in_specs=[
                pl.BlockSpec((tb, F), lambda i: (i, 0)),
                pl.BlockSpec((F, OUT), lambda i: (0, 0)),   # resident weights
                pl.BlockSpec((1, OUT), lambda i: (0, 0)),   # resident bias
            ],
            out_specs=pl.BlockSpec((tb, OUT), lambda i: (i, 0)),
            compiler_params=pltpu.CompilerParams(
                dimension_semantics=("parallel",),
                vmem_limit_bytes=vmem_limit,
            ),
        )(features, w_fused, b_fused)

    return out[:, :P], out[:, P:]


def init_params(key, feature_dim, last_layer_dim_pi=4, last_layer_dim_vf=4,
                dtype=jnp.float32):
    """Deterministic init mimicking torch.nn.Linear (uniform(-1/sqrt(fan_in), +))."""
    k1, k2, k3, k4 = jax.random.split(key, 4)
    bound = 1.0 / (feature_dim ** 0.5)
    # Weights stored as [feature_dim, out_dim] (transpose of torch's [out, in]).
    w_pi = jax.random.uniform(k1, (feature_dim, last_layer_dim_pi),
                              dtype=dtype, minval=-bound, maxval=bound)
    b_pi = jax.random.uniform(k2, (last_layer_dim_pi,),
                              dtype=dtype, minval=-bound, maxval=bound)
    w_vf = jax.random.uniform(k3, (feature_dim, last_layer_dim_vf),
                              dtype=dtype, minval=-bound, maxval=bound)
    b_vf = jax.random.uniform(k4, (last_layer_dim_vf,),
                              dtype=dtype, minval=-bound, maxval=bound)
    return w_pi, b_pi, w_vf, b_vf


if __name__ == "__main__":
    # Small shapes consistent with the module: batch=2, feature_dim=32,
    # last_layer_dim_pi=4, last_layer_dim_vf=4.
    B, F, P, V = 2, 32, 4, 4

    key = jax.random.PRNGKey(0)
    k_x, k_params, k_big = jax.random.split(key, 3)
    features = jax.random.normal(k_x, (B, F), dtype=jnp.float32)
    w_pi, b_pi, w_vf, b_vf = init_params(k_params, F, P, V)
    w_fused, b_fused = fuse_params(w_pi, b_pi, w_vf, b_vf)   # once, not per call

    # Small-batch (grid-less, whole-array) path.
    latent_pi, latent_vf = linear_network_forward(features, w_fused, b_fused, P)
    jax.block_until_ready((latent_pi, latent_vf))

    ref_pi = features @ w_pi + b_pi
    ref_vf = features @ w_vf + b_vf
    assert latent_pi.shape == (B, P) and latent_vf.shape == (B, V)
    assert jnp.allclose(latent_pi, ref_pi, atol=1e-5, rtol=1e-5)
    assert jnp.allclose(latent_vf, ref_vf, atol=1e-5, rtol=1e-5)

    # Exercise the batch-tiled path with a ragged batch (not a tile multiple)
    # and a larger feature dim so the VMEM gate picks the grid path.
    Bb, Fb = 4100, 1024
    wb_pi, bb_pi, wb_vf, bb_vf = init_params(k_big, Fb, P, V)
    wb_fused, bb_fused = fuse_params(wb_pi, bb_pi, wb_vf, bb_vf)
    feats_big = jax.random.normal(jax.random.fold_in(k_big, 1), (Bb, Fb),
                                  dtype=jnp.float32)
    pi_big, vf_big = linear_network_forward(feats_big, wb_fused, bb_fused, P)
    jax.block_until_ready((pi_big, vf_big))

    ref_pi_big = jnp.dot(feats_big, wb_pi,
                         precision=jax.lax.Precision.HIGHEST) + bb_pi
    ref_vf_big = jnp.dot(feats_big, wb_vf,
                         precision=jax.lax.Precision.HIGHEST) + bb_vf
    assert pi_big.shape == (Bb, P) and vf_big.shape == (Bb, V)
    assert jnp.allclose(pi_big, ref_pi_big, atol=1e-4, rtol=1e-4)
    assert jnp.allclose(vf_big, ref_vf_big, atol=1e-4, rtol=1e-4)

    print("KERNEL_OK")
</pallas_src>

<mosaic_0001>
module attributes {stable_mosaic.version = 11 : i64} {
  func.func @_fused_linear_kernel(%arg0: memref<2x32xf32, #tpu.memory_space<vmem>>, %arg1: memref<32x8xf32, #tpu.memory_space<vmem>>, %arg2: memref<1x8xf32, #tpu.memory_space<vmem>>, %arg3: memref<2x8xf32, #tpu.memory_space<vmem>>) attributes {dimension_semantics = [], scalar_prefetch = 0 : i64, scratch_operands = 0 : i64, tpu.core_type = #tpu.core_type<tc>} {
    %c0 = arith.constant 0 : index
    %c0_0 = arith.constant 0 : index
    %0 = vector.load %arg0[%c0, %c0_0] : memref<2x32xf32, #tpu.memory_space<vmem>>, vector<2x32xf32>
    %c0_1 = arith.constant 0 : index
    %c0_2 = arith.constant 0 : index
    %1 = vector.load %arg1[%c0_1, %c0_2] : memref<32x8xf32, #tpu.memory_space<vmem>>, vector<32x8xf32>
    %cst = arith.constant dense<0.000000e+00> : vector<2x8xf32>
    %2 = tpu.matmul %0, %1, %cst {dimension_numbers = #tpu.dot_dimension_numbers<[1], [0], [0], [1], [0, 0, 1, 1], [], []>} : vector<2x32xf32>, vector<32x8xf32>, vector<2x8xf32> -> vector<2x8xf32>
    %c0_3 = arith.constant 0 : index
    %c0_4 = arith.constant 0 : index
    %3 = vector.load %arg2[%c0_3, %c0_4] : memref<1x8xf32, #tpu.memory_space<vmem>>, vector<1x8xf32>
    %4 = vector.broadcast %3 : vector<1x8xf32> to vector<2x8xf32>
    %5 = arith.addf %2, %4 : vector<2x8xf32>
    %c0_5 = arith.constant 0 : index
    %c0_6 = arith.constant 0 : index
    %6 = vector.load %arg3[%c0_5, %c0_6] : memref<2x8xf32, #tpu.memory_space<vmem>>, vector<2x8xf32>
    tpu.vector_store %arg3[%c0_5, %c0_6], %5 {strides = array<i32>} : memref<2x8xf32, #tpu.memory_space<vmem>>, vector<2x8xf32>,
    return
  }
}

</mosaic_0001>

<llo_original>
// kernel: tpu_custom_call.1
$region0: #{tpu_custom_call.1}
  #allocation0 [shape = 'u32[]', space=smem, size = 0x4, offset = 0x4, fixed_abs, tag = 'smem constant byte address 0x4 - core index']
  #allocation1 [shape = 'u32[144,128]{1,0:T(1,128)}', space=vmem, size = 0x12000, scoped, tag = 'internal scratch']
  %s0 = inlined_call_operand.vmem [shape: f32[2,32], index: 0, kind: input, shape index: {}]
  %s1 = inlined_call_operand.vmem [shape: f32[32,8], index: 1, kind: input, shape index: {}]
  %s2 = inlined_call_operand.vmem [shape: f32[1,8], index: 2, kind: input, shape index: {}]
  %s3 = inlined_call_operand.hbm [shape: f32[2,8], index: 3, kind: output, shape index: {}]
  %s4 = sld [smem:[#allocation0]]
  $region22: #{tpu_custom_call.1} parent=0
    _
  %s6 = ssub.s32 1, %s4
  %s7 = scalar_select 0, %s6, %s4
  $region1: #{tpu_custom_call.1} parent=0
    #allocation2 [shape = 'u8[1024]{0}', space=vmem, size = 0x400, scoped, tag = 'output window, operand 0, single buffered']
    #allocation3 [shape = 's32[1]{0}', space=sflag, size = 0x4, scoped, tag = 'scoped memory for tpu_custom_call.1']
    %8 = vsyncpa [#allocation3], 0
    // Predicated region
    $region2: #{tpu_custom_call.1} parent=1 // pred_check
      _
    $region3: #{tpu_custom_call.1} parent=1 // pred_check_branch
      %10 = sbr.rel (0) target = $region5
    $region4: #{tpu_custom_call.1} parent=1 // pred_region
      _
    $region5: #{tpu_custom_call.1} parent=1 // pred_fallthru
      _
    // Predicated region
    $region6: #{tpu_custom_call.1} parent=1 // pred_check
      _
    $region7: #{tpu_custom_call.1} parent=1 // pred_check_branch
      %12 = sbr.rel (0) target = $region9
    $region8: #{tpu_custom_call.1} parent=1 // pred_region
      _
    $region9: #{tpu_custom_call.1} parent=1 // pred_fallthru
      _
    // Predicated region
    $region10: #{tpu_custom_call.1} parent=1 // pred_check
      _
    $region11: #{tpu_custom_call.1} parent=1 // pred_check_branch
      %14 = sbr.rel (0) target = $region13
    $region12: #{tpu_custom_call.1} parent=1 // pred_region
      _
    $region13: #{tpu_custom_call.1} parent=1 // pred_fallthru
      _
    %v15 = vld [vmem:[%s0] sm:$0x3]
    %v16 = vld [vmem:[%s1] sm:$0xff]
    %v17 = vld [vmem:[%s1 + $0x8] sm:$0xff]
    %v18 = vld [vmem:[%s1 + $0x10] sm:$0xff]
    %v19 = vld [vmem:[%s1 + $0x18] sm:$0xff]
    %v20 = vld [vmem:[%s2] sm:$0x1]
    %v22 = vlaneseq
    %v23 = vshrl.u32 %v22, 7
    %v24 = vsub.s32 0, %v23
    %v25 = vrot.slane %v20, %v24
    %vm27 = vcmask 261120
    %v29 = vsel %vm27, %v15, 0
    %31 = vmatprep.subr.mxu0 0.0
    %32 = vmatpush1.msra.mxu0 0.0
    %33 = vmatprep.subr.mxu0 0.0
    %34 = vmatpush1.msra.mxu0 0.0
    %35 = vmatprep.subr.mxu0 0.0
    %36 = vmatpush1.msra.mxu0 0.0
    %37 = vmatprep.subr.mxu0 0.0
    %38 = vmatpush1.msra.mxu0 0.0
    %39 = vmatprep.subr.mxu0 0.0
    %40 = vmatpush1.msra.mxu0 0.0
    %41 = vmatprep.subr.mxu0 0.0
    %42 = vmatpush1.msra.mxu0 0.0
    %43 = vmatprep.subr.mxu0 0.0
    %44 = vmatpush1.msra.mxu0 0.0
    %45 = vmatprep.subr.mxu0 0.0
    %46 = vmatpush1.msra.mxu0 0.0
    %47 = vmatprep.subr.mxu0 0.0
    %48 = vmatpush1.msra.mxu0 0.0
    %49 = vmatprep.subr.mxu0 0.0
    %50 = vmatpush1.msra.mxu0 0.0
    %51 = vmatprep.subr.mxu0 0.0
    %52 = vmatpush1.msra.mxu0 0.0
    %53 = vmatprep.subr.mxu0 0.0
    %54 = vmatpush1.msra.mxu0 0.0
    %55 = vmatprep.subr.mxu0 0.0
    %56 = vmatpush1.msra.mxu0 %v19
    %57 = vmatprep.subr.mxu0 0.0
    %58 = vmatpush1.msra.mxu0 %v18
    %59 = vmatprep.subr.mxu0 0.0
    %60 = vmatpush1.msra.mxu0 %v17
    %61 = vmatprep.subr.mxu0 0.0
    %62 = vmatpush1.msra.mxu0 %v16
    %63 = vmatprep.subr.mxu0 0.0
    %64 = vmatpush2.msra.mxu0 0.0
    %65 = vmatprep.subr.mxu0 0.0
    %66 = vmatpush2.msra.mxu0 0.0
    %67 = vmatprep.subr.mxu0 0.0
    %68 = vmatpush2.msra.mxu0 0.0
    %69 = vmatprep.subr.mxu0 0.0
    %70 = vmatpush2.msra.mxu0 0.0
    %71 = vmatprep.subr.mxu0 0.0
    %72 = vmatpush2.msra.mxu0 0.0
    %73 = vmatprep.subr.mxu0 0.0
    %74 = vmatpush2.msra.mxu0 0.0
    %75 = vmatprep.subr.mxu0 0.0
    %76 = vmatpush2.msra.mxu0 0.0
    %77 = vmatprep.subr.mxu0 0.0
    %78 = vmatpush2.msra.mxu0 0.0
    %79 = vmatprep.subr.mxu0 0.0
    %80 = vmatpush2.msra.mxu0 0.0
    %81 = vmatprep.subr.mxu0 0.0
    %82 = vmatpush2.msra.mxu0 0.0
    %83 = vmatprep.subr.mxu0 0.0
    %84 = vmatpush2.msra.mxu0 0.0
    %85 = vmatprep.subr.mxu0 0.0
    %86 = vmatpush2.msra.mxu0 0.0
    %87 = vmatprep.subr.mxu0 0.0
    %88 = vmatpush2.msra.mxu0 0.0
    %89 = vmatprep.subr.mxu0 0.0
    %90 = vmatpush2.msra.mxu0 0.0
    %91 = vmatprep.subr.mxu0 0.0
    %92 = vmatpush2.msra.mxu0 0.0
    %93 = vmatprep.subr.mxu0 0.0
    %94 = vmatpush2.msra.mxu0 0.0
    %95 = vmatprep.mubr.f32.mxu0 0.0
    %96 = vmatmul.mubr.f32.gmra.mxu0 %v29
    %v97 = vpop.f32.mrf.mxu0
    %v98 = vadd.f32 %v25, %v97
    %v99 = vpop.f32.mrf.mxu0
    %100 = vdwg.mxu0
    %vm101 = vcmask 58368
    %102 = vst.msk [vmem:[#allocation2] sm:$0x3] %vm101, %v98
    // Predicated region
    $region14: #{tpu_custom_call.1} parent=1 // pred_check
      _
    $region15: #{tpu_custom_call.1} parent=1 // pred_check_branch
      %104 = sbr.rel (0) target = $region17
    $region16: #{tpu_custom_call.1} parent=1 // pred_region
      %s106 = ssub.s32 32, 32
      %107 = vsyncadd [#allocation3], %s106
      %s109 = sshll.u32 [#allocation2], 4
      %s110 = int_to_ptr.vmem [resolvable:$true] %s109
      %112 = dma.vmem_to_hbm [thread:$0]  %s110, 32, %s3, [#allocation3]
    $region17: #{tpu_custom_call.1} parent=1 // pred_fallthru
      _
    // Predicated region
    $region18: #{tpu_custom_call.1} parent=1 // pred_check
      _
    $region19: #{tpu_custom_call.1} parent=1 // pred_check_branch
      %114 = sbr.rel (0) target = $region21
    $region20: #{tpu_custom_call.1} parent=1 // pred_region
      %115 = dma.done [#allocation3], 32
    $region21: #{tpu_custom_call.1} parent=1 // pred_fallthru
      _
    %116 = vsyncpa [#allocation3], 1

</llo_original>
